<compile_context>
chip_gen: v5e
topology: v5e:2x2
jax: 0.10.0
libtpu: 0.0.40
codegen_flags: <defaults>
</compile_context>

<pallas_src>
import functools

import jax
import jax.numpy as jnp
import numpy as np
from jax.experimental import pallas as pl
from jax.experimental.pallas import tpu as pltpu


def _cdiv(a, b):
    return (a + b - 1) // b


def _vq_kernel(n_code, s_pad, train, *refs):
    """One (head, M_outer, M_inner) step of LearnableVQ in the transposed domain.

    train=True refs:
      vecs_ref (1,K,Mt) bf16 | cb_ref (1,S_pad,K) bf16 | mask_ref (1,Mt) f32
      quant_ref (1,K,Mt) bf16 | sc_ref (1,1,Mt) i32
      loss_ref (1,1,1,1) f32 | csum_ref (1,1,S_pad,K) f32 | ccount_ref (1,1,S_pad,1) f32
      csq_ref (S_pad,1) f32 scratch (|c_s|^2, recomputed when M_inner == 0)
    train=False refs: vecs_ref, cb_ref, quant_ref, sc_ref, csq_ref.
    loss/csum/ccount are output-resident accumulators over the M_inner grid axis.
    """
    if train:
        (vecs_ref, cb_ref, mask_ref,
         quant_ref, sc_ref, loss_ref, csum_ref, ccount_ref, csq_ref) = refs
    else:
        vecs_ref, cb_ref, quant_ref, sc_ref, csq_ref = refs

    i = pl.program_id(2)

    x_t = vecs_ref[0]                     # (K, Mt) bf16
    cb = cb_ref[0]                        # (S_pad, K) bf16
    mt = x_t.shape[1]

    @pl.when(i == 0)
    def _init():
        cb_f = cb.astype(jnp.float32)
        csq_ref[...] = jnp.sum(cb_f * cb_f, axis=-1, keepdims=True)     # (S_pad, 1)
        if train:
            loss_ref[...] = jnp.zeros_like(loss_ref)
            csum_ref[...] = jnp.zeros_like(csum_ref)
            ccount_ref[...] = jnp.zeros_like(ccount_ref)

    # Reduced distances d[s, m] = |c_s|^2 - 2 c_s . x_m   (|x_m|^2 is constant
    # per column, so argmin/min are unchanged; added back for the error term).
    xc_t = jnp.dot(cb, x_t, preferred_element_type=jnp.float32)          # (S_pad, Mt)
    d_t = csq_ref[...] - 2.0 * xc_t

    s_iota = jax.lax.broadcasted_iota(jnp.int32, (s_pad, mt), 0)
    if n_code != s_pad:                   # static: only when codebook was padded
        d_t = jnp.where(s_iota < n_code, d_t, jnp.inf)

    # Nearest code, first-index tie-break (== argmin), lane-major.
    mn_row = jnp.min(d_t, axis=0, keepdims=True)                         # (1, Mt)
    idx_f = jnp.where(d_t == mn_row, s_iota.astype(jnp.float32),
                      jnp.float32(s_pad))
    sc_row = jnp.min(idx_f, axis=0, keepdims=True).astype(jnp.int32)     # (1, Mt)
    sc_ref[0] = sc_row                                                   # lane-dense store

    oh_bf = (s_iota == sc_row).astype(jnp.bfloat16)                      # (S_pad, Mt)

    # Codeword gather in the transposed domain: quant_t (K, Mt) = cb^T @ one_hot.
    # Exact bf16 (a one-hot gather of bf16 rows), so the bf16 output is lossless.
    quant_ref[0] = jax.lax.dot_general(
        cb, oh_bf, (((0,), (0,)), ((), ())),
        preferred_element_type=jnp.float32).astype(jnp.bfloat16)

    if train:
        m_row = mask_ref[...]                                            # (1, Mt) f32

        # Commit-loss numerator: sum_m mask_m * relu(|x_m|^2 + mn_m).
        x_f = x_t.astype(jnp.float32)
        xsq_row = jnp.sum(x_f * x_f, axis=0, keepdims=True)              # (1, Mt)
        err_row = jnp.maximum(xsq_row + mn_row, 0.0)
        loss_ref[0, 0] += jnp.sum(m_row * err_row, axis=1, keepdims=True)  # (1, 1)

        # EMA statistics: masked one-hot built once in bf16 (exact for 0/1 masks),
        # csum = r @ x_t^T is a plain contract-Mt MXU matmul, count reduce in f32.
        r_bf = oh_bf * m_row.astype(jnp.bfloat16)                        # (S_pad, Mt)
        csum_ref[0, 0] += jax.lax.dot_general(
            r_bf, x_t, (((1,), (1,)), ((), ())),
            preferred_element_type=jnp.float32)                          # (S_pad, K)
        ccount_ref[0, 0] += jnp.sum(r_bf.astype(jnp.float32), axis=1,
                                    keepdims=True)                       # (S_pad, 1)


@functools.partial(jax.jit, static_argnames=("c_gamma", "n_device",
                                              "n_block_per_update", "is_train",
                                              "block_m", "m_split"))
def learnable_vq_forward(vecs, loss_mask, c_sum, c_count, *, c_gamma=0.99,
                         n_device=1, n_block_per_update=1, is_train=True,
                         block_m=1024, m_split=2):
    """Functional equivalent of LearnableVQ.forward (EMA buffers returned, not mutated)."""
    B, H, L, K = vecs.shape
    S = c_sum.shape[1]
    block_m = max(128, 128 * (block_m // 128))

    # get_codebook(): c_sum / clamp(c_count, min=0.01)
    codebook = (c_sum.astype(jnp.float32)
                / jnp.maximum(c_count.astype(jnp.float32), 0.01)[..., None])   # (H, S, K)

    if is_train and loss_mask is None:
        loss_mask = jnp.ones((B, L), dtype=jnp.float32)

    # ---- layout plumbing: K-on-sublane / M-on-lane bf16 slabs (H, K, M) ----
    M = B * L
    vecs_t = jnp.transpose(vecs.astype(jnp.bfloat16), (1, 3, 0, 2)).reshape(H, K, M)

    # pad n_code (sublane dim of the one-hot/distance domain) to a multiple of 8
    S_pad = _cdiv(S, 8) * 8
    if S_pad != S:
        codebook = jnp.pad(codebook, ((0, 0), (0, S_pad - S), (0, 0)))
    cb_bf = codebook.astype(jnp.bfloat16)

    # M tiling: (M_outer "parallel" for v7x dual-TC, M_inner "arbitrary" reduction)
    if M <= block_m:
        Mt, n_inner, n_split = M, 1, 1
    else:
        Mt = block_m
        n_m = _cdiv(M, Mt)
        n_split = max(1, min(m_split, n_m))
        n_inner = _cdiv(n_m, n_split)
    M_pad = Mt * n_inner * n_split
    if M_pad != M:
        vecs_t = jnp.pad(vecs_t, ((0, 0), (0, 0), (0, M_pad - M)))

    vin_spec = pl.BlockSpec((1, K, Mt), lambda h, j, i: (h, 0, j * n_inner + i))
    cb_spec = pl.BlockSpec((1, S_pad, K), lambda h, j, i: (h, 0, 0))

    in_arrays = [vecs_t, cb_bf]
    in_specs = [vin_spec, cb_spec]
    out_shapes = [
        jax.ShapeDtypeStruct((H, K, M_pad), jnp.bfloat16),   # quantized (transposed, bf16)
        jax.ShapeDtypeStruct((H, 1, M_pad), jnp.int32),      # shortcodes (lane-dense)
    ]
    out_specs = [
        pl.BlockSpec((1, K, Mt), lambda h, j, i: (h, 0, j * n_inner + i)),
        pl.BlockSpec((1, 1, Mt), lambda h, j, i: (h, 0, j * n_inner + i)),
    ]

    if is_train:
        mask_m = loss_mask.astype(jnp.float32).reshape(1, M)
        if M_pad != M:
            mask_m = jnp.pad(mask_m, ((0, 0), (0, M_pad - M)))     # padded rows: mask 0
        in_arrays.append(mask_m)
        in_specs.append(pl.BlockSpec((1, Mt), lambda h, j, i: (0, j * n_inner + i)))
        out_shapes += [
            jax.ShapeDtypeStruct((H, n_split, 1, 1), jnp.float32),      # loss numerator
            jax.ShapeDtypeStruct((H, n_split, S_pad, K), jnp.float32),  # sum r_vec
            jax.ShapeDtypeStruct((H, n_split, S_pad, 1), jnp.float32),  # sum r_count
        ]
        out_specs += [
            pl.BlockSpec((1, 1, 1, 1), lambda h, j, i: (h, j, 0, 0)),
            pl.BlockSpec((1, 1, S_pad, K), lambda h, j, i: (h, j, 0, 0)),
            pl.BlockSpec((1, 1, S_pad, 1), lambda h, j, i: (h, j, 0, 0)),
        ]

    grid_spec = pltpu.PrefetchScalarGridSpec(
        num_scalar_prefetch=0,
        grid=(H, n_split, n_inner),                 # M_inner last (EMA/loss reduction axis)
        in_specs=in_specs,
        out_specs=out_specs,
        scratch_shapes=[pltpu.VMEM((S_pad, 1), jnp.float32)],   # |c_s|^2 cache
    )

    outs = pl.pallas_call(
        functools.partial(_vq_kernel, S, S_pad, bool(is_train)),
        out_shape=tuple(out_shapes),
        grid_spec=grid_spec,
        compiler_params=pltpu.CompilerParams(
            dimension_semantics=("parallel", "parallel", "arbitrary")),
    )(*in_arrays)

    if is_train:
        quant_t, sc_hm, loss_num, csum_hat, ccount_hat = outs
    else:
        quant_t, sc_hm = outs

    quantized = jnp.transpose(quant_t[:, :, :M].reshape(H, K, B, L),
                              (2, 0, 3, 1)).astype(vecs.dtype)
    shortcodes = jnp.transpose(sc_hm[:, 0, :M].reshape(H, B, L), (1, 0, 2))

    # straight-through estimator: value == quantized, gradient flows to vecs
    vecs_hat = jax.lax.stop_gradient(quantized) + vecs - jax.lax.stop_gradient(vecs)

    if is_train:
        commit_loss = jnp.sum(loss_num) / (jnp.sum(loss_mask) + 1e-6)
        scale = float(n_device * n_block_per_update)
        c_sum_hat = scale * jnp.sum(csum_hat, axis=1)[:, :S, :]
        c_count_hat = scale * jnp.sum(ccount_hat, axis=1)[:, :S, 0]
        new_c_sum = (1.0 - c_gamma) * c_sum_hat + c_gamma * c_sum
        new_c_count = (1.0 - c_gamma) * c_count_hat + c_gamma * c_count
        codebook_loss = jnp.float32(0.0)
    else:
        commit_loss = jnp.float32(0.0)
        codebook_loss = jnp.float32(0.0)
        new_c_sum, new_c_count = c_sum, c_count

    # TODO(synk): PyTorch mutates registered buffers (self.c_sum/self.c_count) in place;
    # here the updated EMA buffers are returned functionally instead.
    return {
        "quantized": vecs_hat,
        "shortcodes": shortcodes,
        "l_commit": commit_loss,
        "l_codebook": codebook_loss,
        "c_sum": new_c_sum,
        "c_count": new_c_count,
    }


def _reference_forward(vecs, loss_mask, c_sum, c_count, c_gamma=0.99):
    """Pure-JAX mirror of the PyTorch module, using the same bf16 MXU-input
    rounding as the kernel so argmin ties resolve identically.
    (argmin(dist2) == argmin(dist2 - |x|^2) since |x|^2 is constant per row.)"""
    codebook = c_sum / jnp.maximum(c_count, 0.01)[..., None]
    vecs_bf = vecs.astype(jnp.bfloat16)
    cb_bf = codebook.astype(jnp.bfloat16)
    vecs_f = vecs_bf.astype(jnp.float32)
    cb_f = cb_bf.astype(jnp.float32)

    c_sq = jnp.sum(cb_f ** 2, -1)                                         # (H, S)
    x_dot_c = jnp.einsum("bhlk,hsk->bhls", vecs_bf, cb_bf,
                         preferred_element_type=jnp.float32)              # (B,H,L,S)
    d = c_sq[None, :, None, :] - 2.0 * x_dot_c                            # dist2 - |x|^2
    shortcodes = jnp.argmin(d, -1)
    x_sq = jnp.sum(vecs_f ** 2, -1)                                       # (B,H,L)
    errs2 = jnp.maximum(jnp.min(d, -1) + x_sq, 0.0)
    one_hot = jax.nn.one_hot(shortcodes, codebook.shape[1], dtype=jnp.float32)
    quantized = jnp.einsum("bhls,hsk->bhlk", one_hot, cb_f)
    commit = jnp.sum(loss_mask[:, None, :] * errs2) / (jnp.sum(loss_mask) + 1e-6)
    r = one_hot * loss_mask[:, None, :, None]
    r_sum = r.sum(2)
    r_vec = jnp.einsum("bhls,bhlk->bhsk", r.astype(jnp.bfloat16), vecs_bf,
                       preferred_element_type=jnp.float32)
    new_c_sum = (1 - c_gamma) * r_vec.sum(0) + c_gamma * c_sum
    new_c_count = (1 - c_gamma) * r_sum.sum(0) + c_gamma * c_count
    return quantized, shortcodes, commit, new_c_sum, new_c_count


if __name__ == "__main__":
    # Small shapes consistent with the module: n_head=4, n_code=16, d_k=32, batch=2, seq=8
    B, H, L, K, S = 2, 4, 8, 32, 16
    c_gamma = 0.99

    key = jax.random.PRNGKey(0)
    k_vecs, k_csum, k_mask = jax.random.split(key, 3)

    vecs = jax.random.normal(k_vecs, (B, H, L, K), dtype=jnp.float32)
    # Module __init__ uses c_sum=zeros / c_count=ones; use a deterministic random
    # c_sum instead so the codebook is non-degenerate (synthetic init, not a checkpoint).
    c_sum = 0.5 * jax.random.normal(k_csum, (H, S, K), dtype=jnp.float32)
    c_count = jnp.ones((H, S), dtype=jnp.float32)
    loss_mask = (jax.random.uniform(k_mask, (B, L)) > 0.3).astype(jnp.float32)

    out = learnable_vq_forward(vecs, loss_mask, c_sum, c_count, c_gamma=c_gamma)
    jax.block_until_ready(out)

    # Verify against the pure-JAX reference of the PyTorch forward.
    ref_q, ref_sc, ref_commit, ref_csum, ref_ccount = _reference_forward(
        vecs, loss_mask, c_sum, c_count, c_gamma)

    np.testing.assert_allclose(np.asarray(out["quantized"]), np.asarray(ref_q),
                               rtol=1e-5, atol=1e-5)
    np.testing.assert_array_equal(np.asarray(out["shortcodes"]), np.asarray(ref_sc))
    np.testing.assert_allclose(np.asarray(out["l_commit"]), np.asarray(ref_commit),
                               rtol=1e-4, atol=1e-4)
    np.testing.assert_allclose(np.asarray(out["c_sum"]), np.asarray(ref_csum),
                               rtol=1e-4, atol=1e-5)
    np.testing.assert_allclose(np.asarray(out["c_count"]), np.asarray(ref_ccount),
                               rtol=1e-5, atol=1e-5)

    # Exercise the eval path (statically drops the loss/EMA outputs and compute).
    out_eval = learnable_vq_forward(vecs, None, c_sum, c_count, c_gamma=c_gamma,
                                    is_train=False)
    jax.block_until_ready(out_eval)
    np.testing.assert_array_equal(np.asarray(out_eval["shortcodes"]), np.asarray(ref_sc))

    print("KERNEL_OK")
</pallas_src>

<mosaic_0001>
module attributes {stable_mosaic.version = 11 : i64} {
  func.func @_vq_kernel(%arg0: i32, %arg1: i32, %arg2: i32, %arg3: memref<1x32x16xbf16, #tpu.memory_space<vmem>>, %arg4: memref<1x16x32xbf16, #tpu.memory_space<vmem>>, %arg5: memref<1x16xf32, #tpu.memory_space<vmem>>, %arg6: memref<1x32x16xbf16, #tpu.memory_space<vmem>>, %arg7: memref<1x1x16xi32, #tpu.memory_space<vmem>>, %arg8: memref<1x1x1x1xf32, #tpu.memory_space<vmem>>, %arg9: memref<1x1x16x32xf32, #tpu.memory_space<vmem>>, %arg10: memref<1x1x16x1xf32, #tpu.memory_space<vmem>>, %arg11: memref<16x1xf32, #tpu.memory_space<vmem>>) attributes {dimension_semantics = [#tpu.dimension_semantics<parallel>, #tpu.dimension_semantics<parallel>, #tpu.dimension_semantics<arbitrary>], iteration_bounds = array<i64: 4, 1, 1>, scalar_prefetch = 0 : i64, scratch_operands = 1 : i64, tpu.core_type = #tpu.core_type<tc>, window_params = [{transform_indices = @transform_0, window_bounds = array<i64: 1, 32, 16>}, {transform_indices = @transform_1, window_bounds = array<i64: 1, 16, 32>}, {transform_indices = @transform_2, window_bounds = array<i64: 1, 16>}, {transform_indices = @transform_3, window_bounds = array<i64: 1, 32, 16>}, {transform_indices = @transform_4, window_bounds = array<i64: 1, 1, 16>}, {transform_indices = @transform_5, window_bounds = array<i64: 1, 1, 1, 1>}, {transform_indices = @transform_6, window_bounds = array<i64: 1, 1, 16, 32>}, {transform_indices = @transform_7, window_bounds = array<i64: 1, 1, 16, 1>}]} {
    %c0 = arith.constant 0 : index
    %c0_0 = arith.constant 0 : index
    %c0_1 = arith.constant 0 : index
    %0 = vector.load %arg3[%c0, %c0_0, %c0_1] : memref<1x32x16xbf16, #tpu.memory_space<vmem>>, vector<1x32x16xbf16>
    %1 = vector.shape_cast %0 : vector<1x32x16xbf16> to vector<32x16xbf16>
    %c0_2 = arith.constant 0 : index
    %c0_3 = arith.constant 0 : index
    %c0_4 = arith.constant 0 : index
    %2 = vector.load %arg4[%c0_2, %c0_3, %c0_4] : memref<1x16x32xbf16, #tpu.memory_space<vmem>>, vector<1x16x32xbf16>
    %3 = vector.shape_cast %2 : vector<1x16x32xbf16> to vector<16x32xbf16>
    %c0_i32 = arith.constant 0 : i32
    %4 = arith.cmpi eq, %arg2, %c0_i32 : i32
    %5 = arith.extui %4 : i1 to i32
    %c0_i32_5 = arith.constant 0 : i32
    %6 = arith.cmpi ne, %5, %c0_i32_5 : i32
    scf.if %6 {
      %73 = arith.extf %3 : vector<16x32xbf16> to vector<16x32xf32>
      %74 = arith.mulf %73, %73 : vector<16x32xf32>
      %cst_50 = arith.constant dense<0.000000e+00> : vector<16xf32>
      %75 = vector.multi_reduction <add>, %74, %cst_50 [1] : vector<16x32xf32> to vector<16xf32>
      %76 = vector.shape_cast %75 : vector<16xf32> to vector<16x1xf32>
      %c0_51 = arith.constant 0 : index
      %c0_52 = arith.constant 0 : index
      %77 = vector.load %arg11[%c0_51, %c0_52] : memref<16x1xf32, #tpu.memory_space<vmem>>, vector<16x1xf32>
      tpu.vector_store %arg11[%c0_51, %c0_52], %76 {strides = array<i32>} : memref<16x1xf32, #tpu.memory_space<vmem>>, vector<16x1xf32>,
      %cst_53 = arith.constant 0.000000e+00 : f32
      %78 = vector.broadcast %cst_53 : f32 to vector<1x1x1x1xf32>
      %c0_54 = arith.constant 0 : index
      %c0_55 = arith.constant 0 : index
      %c0_56 = arith.constant 0 : index
      %c0_57 = arith.constant 0 : index
      %79 = vector.load %arg8[%c0_54, %c0_55, %c0_56, %c0_57] : memref<1x1x1x1xf32, #tpu.memory_space<vmem>>, vector<1x1x1x1xf32>
      tpu.vector_store %arg8[%c0_54, %c0_55, %c0_56, %c0_57], %78 {strides = array<i32>} : memref<1x1x1x1xf32, #tpu.memory_space<vmem>>, vector<1x1x1x1xf32>,
      %cst_58 = arith.constant 0.000000e+00 : f32
      %80 = vector.broadcast %cst_58 : f32 to vector<1x1x16x32xf32>
      %c0_59 = arith.constant 0 : index
      %c0_60 = arith.constant 0 : index
      %c0_61 = arith.constant 0 : index
      %c0_62 = arith.constant 0 : index
      %81 = vector.load %arg9[%c0_59, %c0_60, %c0_61, %c0_62] : memref<1x1x16x32xf32, #tpu.memory_space<vmem>>, vector<1x1x16x32xf32>
      tpu.vector_store %arg9[%c0_59, %c0_60, %c0_61, %c0_62], %80 {strides = array<i32>} : memref<1x1x16x32xf32, #tpu.memory_space<vmem>>, vector<1x1x16x32xf32>,
      %cst_63 = arith.constant 0.000000e+00 : f32
      %82 = vector.broadcast %cst_63 : f32 to vector<1x1x16x1xf32>
      %c0_64 = arith.constant 0 : index
      %c0_65 = arith.constant 0 : index
      %c0_66 = arith.constant 0 : index
      %c0_67 = arith.constant 0 : index
      %83 = vector.load %arg10[%c0_64, %c0_65, %c0_66, %c0_67] : memref<1x1x16x1xf32, #tpu.memory_space<vmem>>, vector<1x1x16x1xf32>
      tpu.vector_store %arg10[%c0_64, %c0_65, %c0_66, %c0_67], %82 {strides = array<i32>} : memref<1x1x16x1xf32, #tpu.memory_space<vmem>>, vector<1x1x16x1xf32>,
    } else {
    }
    %cst = arith.constant dense<0.000000e+00> : vector<16x16xf32>
    %7 = tpu.matmul %3, %1, %cst {dimension_numbers = #tpu.dot_dimension_numbers<[1], [0], [0], [1], [0, 0, 1, 1], [], []>} : vector<16x32xbf16>, vector<32x16xbf16>, vector<16x16xf32> -> vector<16x16xf32>
    %c0_6 = arith.constant 0 : index
    %c0_7 = arith.constant 0 : index
    %8 = vector.load %arg11[%c0_6, %c0_7] : memref<16x1xf32, #tpu.memory_space<vmem>>, vector<16x1xf32>
    %cst_8 = arith.constant 2.000000e+00 : f32
    %9 = vector.broadcast %cst_8 : f32 to vector<16x16xf32>
    %10 = arith.mulf %9, %7 : vector<16x16xf32>
    %11 = vector.broadcast %8 : vector<16x1xf32> to vector<16x16xf32>
    %12 = arith.subf %11, %10 : vector<16x16xf32>
    %13 = tpu.iota {dimensions = array<i32: 0>} : vector<16x16xi32>
    %cst_9 = arith.constant dense<0x7F800000> : vector<16xf32>
    %14 = vector.multi_reduction <minimumf>, %12, %cst_9 [0] : vector<16x16xf32> to vector<16xf32>
    %15 = vector.shape_cast %14 : vector<16xf32> to vector<1x16xf32>
    %16 = vector.broadcast %15 : vector<1x16xf32> to vector<16x16xf32>
    %17 = arith.cmpf oeq, %12, %16 : vector<16x16xf32>
    %18 = arith.sitofp %13 : vector<16x16xi32> to vector<16x16xf32>
    %cst_10 = arith.constant 1.600000e+01 : f32
    %19 = vector.broadcast %cst_10 : f32 to vector<16x16xf32>
    %20 = arith.select %17, %18, %19 : vector<16x16xi1>, vector<16x16xf32>
    %cst_11 = arith.constant dense<0x7F800000> : vector<16xf32>
    %21 = vector.multi_reduction <minimumf>, %20, %cst_11 [0] : vector<16x16xf32> to vector<16xf32>
    %22 = vector.shape_cast %21 : vector<16xf32> to vector<1x16xf32>
    %23 = arith.fptosi %22 : vector<1x16xf32> to vector<1x16xi32>
    %c0_12 = arith.constant 0 : index
    %c0_13 = arith.constant 0 : index
    %c0_14 = arith.constant 0 : index
    %24 = vector.load %arg7[%c0_12, %c0_13, %c0_14] : memref<1x1x16xi32, #tpu.memory_space<vmem>>, vector<1x1x16xi32>
    %25 = vector.shape_cast %24 : vector<1x1x16xi32> to vector<1x16xi32>
    %26 = vector.shape_cast %23 : vector<1x16xi32> to vector<1x1x16xi32>
    tpu.vector_store %arg7[%c0_12, %c0_13, %c0_14], %26 {strides = array<i32>} : memref<1x1x16xi32, #tpu.memory_space<vmem>>, vector<1x1x16xi32>,
    %27 = vector.broadcast %23 : vector<1x16xi32> to vector<16x16xi32>
    %28 = arith.cmpi eq, %13, %27 : vector<16x16xi32>
    %29 = arith.extui %28 : vector<16x16xi1> to vector<16x16xi32>
    %30 = arith.sitofp %29 : vector<16x16xi32> to vector<16x16xf32>
    %31 = arith.truncf %30 : vector<16x16xf32> to vector<16x16xbf16>
    %cst_15 = arith.constant dense<0.000000e+00> : vector<32x16xf32>
    %32 = tpu.matmul %3, %31, %cst_15 {dimension_numbers = #tpu.dot_dimension_numbers<[0], [0], [1], [1], [0, 1, 1, 1], [], []>} : vector<16x32xbf16>, vector<16x16xbf16>, vector<32x16xf32> -> vector<32x16xf32>
    %33 = arith.truncf %32 : vector<32x16xf32> to vector<32x16xbf16>
    %c0_16 = arith.constant 0 : index
    %c0_17 = arith.constant 0 : index
    %c0_18 = arith.constant 0 : index
    %34 = vector.load %arg6[%c0_16, %c0_17, %c0_18] : memref<1x32x16xbf16, #tpu.memory_space<vmem>>, vector<1x32x16xbf16>
    %35 = vector.shape_cast %34 : vector<1x32x16xbf16> to vector<32x16xbf16>
    %36 = vector.shape_cast %33 : vector<32x16xbf16> to vector<1x32x16xbf16>
    tpu.vector_store %arg6[%c0_16, %c0_17, %c0_18], %36 {strides = array<i32>} : memref<1x32x16xbf16, #tpu.memory_space<vmem>>, vector<1x32x16xbf16>,
    %c0_19 = arith.constant 0 : index
    %c0_20 = arith.constant 0 : index
    %37 = vector.load %arg5[%c0_19, %c0_20] : memref<1x16xf32, #tpu.memory_space<vmem>>, vector<1x16xf32>
    %38 = arith.extf %1 : vector<32x16xbf16> to vector<32x16xf32>
    %39 = arith.mulf %38, %38 : vector<32x16xf32>
    %cst_21 = arith.constant dense<0.000000e+00> : vector<16xf32>
    %40 = vector.multi_reduction <add>, %39, %cst_21 [0] : vector<32x16xf32> to vector<16xf32>
    %41 = vector.shape_cast %40 : vector<16xf32> to vector<1x16xf32>
    %42 = arith.addf %41, %15 : vector<1x16xf32>
    %cst_22 = arith.constant 0.000000e+00 : f32
    %43 = vector.broadcast %cst_22 : f32 to vector<1x16xf32>
    %44 = arith.maximumf %42, %43 : vector<1x16xf32>
    %c0_23 = arith.constant 0 : index
    %c0_24 = arith.constant 0 : index
    %c0_25 = arith.constant 0 : index
    %c0_26 = arith.constant 0 : index
    %45 = vector.load %arg8[%c0_23, %c0_24, %c0_25, %c0_26] : memref<1x1x1x1xf32, #tpu.memory_space<vmem>>, vector<1x1x1x1xf32>
    %46 = vector.shape_cast %45 : vector<1x1x1x1xf32> to vector<1x1xf32>
    %47 = arith.mulf %37, %44 : vector<1x16xf32>
    %cst_27 = arith.constant dense<0.000000e+00> : vector<1xf32>
    %48 = vector.multi_reduction <add>, %47, %cst_27 [1] : vector<1x16xf32> to vector<1xf32>
    %49 = vector.shape_cast %48 : vector<1xf32> to vector<1x1xf32>
    %50 = arith.addf %46, %49 : vector<1x1xf32>
    %c0_28 = arith.constant 0 : index
    %c0_29 = arith.constant 0 : index
    %c0_30 = arith.constant 0 : index
    %c0_31 = arith.constant 0 : index
    %51 = vector.load %arg8[%c0_28, %c0_29, %c0_30, %c0_31] : memref<1x1x1x1xf32, #tpu.memory_space<vmem>>, vector<1x1x1x1xf32>
    %52 = vector.shape_cast %51 : vector<1x1x1x1xf32> to vector<1x1xf32>
    %53 = vector.shape_cast %50 : vector<1x1xf32> to vector<1x1x1x1xf32>
    tpu.vector_store %arg8[%c0_28, %c0_29, %c0_30, %c0_31], %53 {strides = array<i32>} : memref<1x1x1x1xf32, #tpu.memory_space<vmem>>, vector<1x1x1x1xf32>,
    %54 = arith.truncf %37 : vector<1x16xf32> to vector<1x16xbf16>
    %55 = vector.broadcast %54 : vector<1x16xbf16> to vector<16x16xbf16>
    %56 = arith.mulf %31, %55 : vector<16x16xbf16>
    %c0_32 = arith.constant 0 : index
    %c0_33 = arith.constant 0 : index
    %c0_34 = arith.constant 0 : index
    %c0_35 = arith.constant 0 : index
    %57 = vector.load %arg9[%c0_32, %c0_33, %c0_34, %c0_35] : memref<1x1x16x32xf32, #tpu.memory_space<vmem>>, vector<1x1x16x32xf32>
    %58 = vector.shape_cast %57 : vector<1x1x16x32xf32> to vector<16x32xf32>
    %cst_36 = arith.constant dense<0.000000e+00> : vector<16x32xf32>
    %59 = tpu.matmul %56, %1, %cst_36 {dimension_numbers = #tpu.dot_dimension_numbers<[1], [1], [0], [0], [0, 0, 1, 0], [], []>} : vector<16x16xbf16>, vector<32x16xbf16>, vector<16x32xf32> -> vector<16x32xf32>
    %60 = arith.addf %58, %59 : vector<16x32xf32>
    %c0_37 = arith.constant 0 : index
    %c0_38 = arith.constant 0 : index
    %c0_39 = arith.constant 0 : index
    %c0_40 = arith.constant 0 : index
    %61 = vector.load %arg9[%c0_37, %c0_38, %c0_39, %c0_40] : memref<1x1x16x32xf32, #tpu.memory_space<vmem>>, vector<1x1x16x32xf32>
    %62 = vector.shape_cast %61 : vector<1x1x16x32xf32> to vector<16x32xf32>
    %63 = vector.shape_cast %60 : vector<16x32xf32> to vector<1x1x16x32xf32>
    tpu.vector_store %arg9[%c0_37, %c0_38, %c0_39, %c0_40], %63 {strides = array<i32>} : memref<1x1x16x32xf32, #tpu.memory_space<vmem>>, vector<1x1x16x32xf32>,
    %c0_41 = arith.constant 0 : index
    %c0_42 = arith.constant 0 : index
    %c0_43 = arith.constant 0 : index
    %c0_44 = arith.constant 0 : index
    %64 = vector.load %arg10[%c0_41, %c0_42, %c0_43, %c0_44] : memref<1x1x16x1xf32, #tpu.memory_space<vmem>>, vector<1x1x16x1xf32>
    %65 = vector.shape_cast %64 : vector<1x1x16x1xf32> to vector<16x1xf32>
    %66 = arith.extf %56 : vector<16x16xbf16> to vector<16x16xf32>
    %cst_45 = arith.constant dense<0.000000e+00> : vector<16xf32>
    %67 = vector.multi_reduction <add>, %66, %cst_45 [1] : vector<16x16xf32> to vector<16xf32>
    %68 = vector.shape_cast %67 : vector<16xf32> to vector<16x1xf32>
    %69 = arith.addf %65, %68 : vector<16x1xf32>
    %c0_46 = arith.constant 0 : index
    %c0_47 = arith.constant 0 : index
    %c0_48 = arith.constant 0 : index
    %c0_49 = arith.constant 0 : index
    %70 = vector.load %arg10[%c0_46, %c0_47, %c0_48, %c0_49] : memref<1x1x16x1xf32, #tpu.memory_space<vmem>>, vector<1x1x16x1xf32>
    %71 = vector.shape_cast %70 : vector<1x1x16x1xf32> to vector<16x1xf32>
    %72 = vector.shape_cast %69 : vector<16x1xf32> to vector<1x1x16x1xf32>
    tpu.vector_store %arg10[%c0_46, %c0_47, %c0_48, %c0_49], %72 {strides = array<i32>} : memref<1x1x16x1xf32, #tpu.memory_space<vmem>>, vector<1x1x16x1xf32>,
    return
  }
  func.func @transform_0(%arg0: i32, %arg1: i32, %arg2: i32) -> (i32, i32, i32) {
    %c1_i32 = arith.constant 1 : i32
    %0 = arith.muli %arg1, %c1_i32 : i32
    %1 = arith.addi %0, %arg2 : i32
    %c0_i32 = arith.constant 0 : i32
    %c0_i32_0 = arith.constant 0 : i32
    return %arg0, %c0_i32, %1 : i32, i32, i32
  }
  func.func @transform_1(%arg0: i32, %arg1: i32, %arg2: i32) -> (i32, i32, i32) {
    %c0_i32 = arith.constant 0 : i32
    %c0_i32_0 = arith.constant 0 : i32
    %c0_i32_1 = arith.constant 0 : i32
    return %arg0, %c0_i32, %c0_i32_0 : i32, i32, i32
  }
  func.func @transform_2(%arg0: i32, %arg1: i32, %arg2: i32) -> (i32, i32) {
    %c1_i32 = arith.constant 1 : i32
    %0 = arith.muli %arg1, %c1_i32 : i32
    %1 = arith.addi %0, %arg2 : i32
    %c0_i32 = arith.constant 0 : i32
    %c0_i32_0 = arith.constant 0 : i32
    return %c0_i32, %1 : i32, i32
  }
  func.func @transform_3(%arg0: i32, %arg1: i32, %arg2: i32) -> (i32, i32, i32) {
    %c1_i32 = arith.constant 1 : i32
    %0 = arith.muli %arg1, %c1_i32 : i32
    %1 = arith.addi %0, %arg2 : i32
    %c0_i32 = arith.constant 0 : i32
    %c0_i32_0 = arith.constant 0 : i32
    return %arg0, %c0_i32, %1 : i32, i32, i32
  }
  func.func @transform_4(%arg0: i32, %arg1: i32, %arg2: i32) -> (i32, i32, i32) {
    %c1_i32 = arith.constant 1 : i32
    %0 = arith.muli %arg1, %c1_i32 : i32
    %1 = arith.addi %0, %arg2 : i32
    %c0_i32 = arith.constant 0 : i32
    %c0_i32_0 = arith.constant 0 : i32
    return %arg0, %c0_i32, %1 : i32, i32, i32
  }
  func.func @transform_5(%arg0: i32, %arg1: i32, %arg2: i32) -> (i32, i32, i32, i32) {
    %c0_i32 = arith.constant 0 : i32
    %c0_i32_0 = arith.constant 0 : i32
    %c0_i32_1 = arith.constant 0 : i32
    return %arg0, %arg1, %c0_i32, %c0_i32_0 : i32, i32, i32, i32
  }
  func.func @transform_6(%arg0: i32, %arg1: i32, %arg2: i32) -> (i32, i32, i32, i32) {
    %c0_i32 = arith.constant 0 : i32
    %c0_i32_0 = arith.constant 0 : i32
    %c0_i32_1 = arith.constant 0 : i32
    return %arg0, %arg1, %c0_i32, %c0_i32_0 : i32, i32, i32, i32
  }
  func.func @transform_7(%arg0: i32, %arg1: i32, %arg2: i32) -> (i32, i32, i32, i32) {
    %c0_i32 = arith.constant 0 : i32
    %c0_i32_0 = arith.constant 0 : i32
    %c0_i32_1 = arith.constant 0 : i32
    return %arg0, %arg1, %c0_i32, %c0_i32_0 : i32, i32, i32, i32
  }
}

</mosaic_0001>

<llo_original>
// kernel: squeeze.2
$region0: #{squeeze.2}
  %s0 = inlined_call_operand.vmem [shape: s32[4,16], index: 0, kind: input, shape index: {}]
  %s1 = inlined_call_operand.vmem [shape: s32[4,2,8], index: 1, kind: output, shape index: {}]
  $region1: #{squeeze.2} parent=0
    #allocation0 [shape = 'u8[16384]{0}', space=vmem, size = 0x4000, scoped, tag = 'scoped mem for output reshape']
    #allocation1 [shape = 'u8[4096]{0}', space=vmem, size = 0x1000, scoped, tag = 'scoped mem for input reshape']
    %s3 = ssub.s32 16, 1
    %v4 = vld [vmem:[%s0] sm:%s3]
    %5 = vst [vmem:[#allocation1] sm:%s3] %v4
    %v6 = vld [vmem:[#allocation1] sm:$0xf]
    %vm7 = vcmask 64512
    %8 = vst.msk [vmem:[#allocation0] ss:$8 sm:$0xf] %vm7, %v6
    %v9 = vld [vmem:[#allocation1] sm:$0xf]
    %10 = vrot.lane.b32.xlu0 %v9, 120
    %v11 = vpop.permute.xlu0 %10
    %vm12 = vcmask 64512
    %s13 = scalar_lea.vmem [#allocation0], 1
    %14 = vst.msk [vmem:[%s13] ss:$8 sm:$0xf] %vm12, %v11
    %s16 = ssub.s32 4, 1
    %v17 = vld [vmem:[#allocation0] sm:%s16]
    %s19 = ssub.s32 4, 1
    %20 = vst [vmem:[%s1] sm:%s19] %v17
    %s21 = scalar_lea.vmem [#allocation0], 8
    %v22 = vld [vmem:[%s21] sm:%s16]
    %s24 = ssub.s32 4, 1
    %s25 = scalar_lea.vmem %s1, 2
    %26 = vst [vmem:[%s25] sm:%s24] %v22
    %s27 = scalar_lea.vmem [#allocation0], 16
    %v28 = vld [vmem:[%s27] sm:%s16]
    %s30 = ssub.s32 4, 1
    %s31 = scalar_lea.vmem %s1, 4
    %32 = vst [vmem:[%s31] sm:%s30] %v28
    %s33 = scalar_lea.vmem [#allocation0], 24
    %v34 = vld [vmem:[%s33] sm:%s16]
    %s36 = ssub.s32 4, 1
    %s37 = scalar_lea.vmem %s1, 6
    %38 = vst [vmem:[%s37] sm:%s36] %v34

// kernel: learnable_vq_forward.1
$region0: #{learnable_vq_forward.1}
  #allocation0 [shape = 'u32[]', space=smem, size = 0x4, offset = 0x4, fixed_abs, tag = 'smem constant byte address 0x4 - core index']
  #allocation1 [shape = 'u32[72,128]{1,0:T(1,128)}', space=vmem, size = 0x9000, scoped, tag = 'internal scratch']
  #allocation2 [shape = 'f32[16,1]{1,0:T(8,128)}', space=vmem, size = 0x2000, scoped, tag = 'scratch operand']
  %s0 = inlined_call_operand.vmem [shape: bf16[4,32,16], index: 0, kind: input, shape index: {}]
  %s1 = inlined_call_operand.vmem [shape: bf16[4,16,32], index: 1, kind: input, shape index: {}]
  %s2 = inlined_call_operand.vmem [shape: f32[1,16], index: 2, kind: input, shape index: {}]
  %s3 = inlined_call_operand.vmem [shape: bf16[4,32,16], index: 3, kind: output, shape index: {0}]
  %s4 = inlined_call_operand.vmem [shape: s32[4,1,16], index: 4, kind: output, shape index: {1}]
  %s5 = inlined_call_operand.vmem [shape: f32[4,1,1,1], index: 5, kind: output, shape index: {2}]
  %s6 = inlined_call_operand.vmem [shape: f32[4,1,16,32], index: 6, kind: output, shape index: {3}]
  %s7 = inlined_call_operand.vmem [shape: f32[4,1,16,1], index: 7, kind: output, shape index: {4}]
  %8 = xla_tuple %s3, %s4, %s5, %s6, %s7
  %s9 = sld [smem:[#allocation0]]
  $region81: #{learnable_vq_forward.1} parent=0
    _
  %s11 = ssub.s32 1, %s9
  %s12 = scalar_select 0, %s11, %s9
  loop: start=0, step=1, limit=6
  $region2: #{learnable_vq_forward.1} parent=0 // loop_pre_header
    _
  $region3: #{learnable_vq_forward.1} parent=0 // loop_header
    %s14 = sphi 0, %s18
    %p15 = scmp.ge.s32.totalorder %s14, 6
    %s21 = sphi 0, %s40
    %s22 = sphi 0, %s36
    %s23 = sphi 0, %s32
    %s24 = sphi 0, %s21
    %s25 = sphi 0, %s22
    %s26 = sphi 0, %s23
    %s27 = sphi 0, %s24
    %s28 = sphi 0, %s25
    %s29 = sphi 0, %s26
    %s47 = sphi 0, %s49
    %s50 = sphi 0, %s47
    %s51 = sphi 0, %s50
    %s67 = sphi 0, %s51
    %s73 = sphi 0, %s75
    %s76 = sphi 0, %s73
    %s77 = sphi 0, %s76
    %s93 = sphi 0, %s77
    %s101 = sphi 0, %s103
    %s104 = sphi 0, %s101
    %s105 = sphi 0, %s104
    %s121 = sphi 0, %s105
    %s131 = sphi 0, %s133
    %s134 = sphi 0, %s131
    %s135 = sphi 0, %s134
    %s151 = sphi 0, %s135
    %s161 = sphi 0, %s163
    %s164 = sphi 0, %s161
    %s165 = sphi 0, %s164
    %s181 = sphi 0, %s165
    %s189 = sphi 0, %s191
    %s192 = sphi 0, %s189
    %s193 = sphi 0, %s192
    %s209 = sphi 0, %s193
    %s217 = sphi 0, %s219
    %s220 = sphi 0, %s217
    %s221 = sphi 0, %s220
    %s237 = sphi 0, %s221
    %s245 = sphi 0, %s247
    %s248 = sphi 0, %s245
    %s249 = sphi 0, %s248
    %s265 = sphi 0, %s249
  $region4: #{learnable_vq_forward.1} parent=0 // loop_header_branch
    %17 = sbr.rel (%p15) target = $region8
  $region5: #{learnable_vq_forward.1} parent=0 // loop_body
    %s19 = ssub.s32 %s14, 1
    %s20 = ssub.s32 %s14, 2
    %s30 = sadd.s32 1, %s23
    %p31 = scmp.ge.s32.totalorder %s30, 1
    %s32 = scalar_select %p31, 0, %s30
    %s33 = sadd.s32 1, %s22
    %s34 = scalar_select %p31, %s33, %s22
    %p35 = scmp.ge.s32.totalorder %s34, 1
    %s36 = scalar_select %p35, 0, %s34
    %s37 = sadd.s32 1, %s21
    %s38 = scalar_select %p35, %s37, %s21
    %p39 = scmp.ge.s32.totalorder %s38, 4
    %s40 = scalar_select %p39, 0, %s38
    %s41 = sadd.s32 %s22, %s23
    %s42 = sadd.s32 %s36, %s32
    %s43 = ssub.s32 %s21, %s40
    %s44 = ssub.s32 %s41, %s42
    %s45 = sor.u32 %s43, %s44
    %p46 = scmp.eq.s32.totalorder %s45, 0
    %s48 = sadd.s32 %s47, 1
    %s49 = scalar_select %p46, %s47, %s48
    %p52 = pneg %p46
    %p53 = scmp.eq.s32.totalorder %s14, 3
    %p54 = por %p52, %p53
    %p55 = scmp.ne.s32.totalorder %s47, %s50
    %p56 = scmp.eq.s32.totalorder %s14, 0
    %p57 = por %p55, %p56
    %p58 = scmp.ne.s32.totalorder %s47, %s50
    %p59 = scmp.eq.s32.totalorder %s19, 3
    %p60 = por %p58, %p59
    %p61 = scmp.ne.s32.totalorder %s50, %s51
    %p62 = scmp.eq.s32.totalorder %s19, 0
    %p63 = por %p61, %p62
    %p64 = scmp.ne.s32.totalorder %s50, %s51
    %p65 = scmp.eq.s32.totalorder %s20, 3
    %p66 = por %p64, %p65
    %p68 = scmp.ne.s32.totalorder %s51, %s67
    %p69 = scmp.eq.s32.totalorder %s20, 0
    %p70 = por %p68, %p69
    %s71 = ssub.s32 %s21, %s40
    %p72 = scmp.eq.s32.totalorder %s71, 0
    %s74 = sadd.s32 %s73, 1
    %s75 = scalar_select %p72, %s73, %s74
    %p78 = pneg %p72
    %p79 = scmp.eq.s32.totalorder %s14, 3
    %p80 = por %p78, %p79
    %p81 = scmp.ne.s32.totalorder %s73, %s76
    %p82 = scmp.eq.s32.totalorder %s14, 0
    %p83 = por %p81, %p82
    %p84 = scmp.ne.s32.totalorder %s73, %s76
    %p85 = scmp.eq.s32.totalorder %s19, 3
    %p86 = por %p84, %p85
    %p87 = scmp.ne.s32.totalorder %s76, %s77
    %p88 = scmp.eq.s32.totalorder %s19, 0
    %p89 = por %p87, %p88
    %p90 = scmp.ne.s32.totalorder %s76, %s77
    %p91 = scmp.eq.s32.totalorder %s20, 3
    %p92 = por %p90, %p91
    %p94 = scmp.ne.s32.totalorder %s77, %s93
    %p95 = scmp.eq.s32.totalorder %s20, 0
    %p96 = por %p94, %p95
    %s97 = sadd.s32 %s22, %s23
    %s98 = sadd.s32 %s36, %s32
    %s99 = ssub.s32 %s97, %s98
    %p100 = scmp.eq.s32.totalorder %s99, 0
    %s102 = sadd.s32 %s101, 1
    %s103 = scalar_select %p100, %s101, %s102
    %p106 = pneg %p100
    %p107 = scmp.eq.s32.totalorder %s14, 3
    %p108 = por %p106, %p107
    %p109 = scmp.ne.s32.totalorder %s101, %s104
    %p110 = scmp.eq.s32.totalorder %s14, 0
    %p111 = por %p109, %p110
    %p112 = scmp.ne.s32.totalorder %s101, %s104
    %p113 = scmp.eq.s32.totalorder %s19, 3
    %p114 = por %p112, %p113
    %p115 = scmp.ne.s32.totalorder %s104, %s105
    %p116 = scmp.eq.s32.totalorder %s19, 0
    %p117 = por %p115, %p116
    %p118 = scmp.ne.s32.totalorder %s104, %s105
    %p119 = scmp.eq.s32.totalorder %s20, 3
    %p120 = por %p118, %p119
    %p122 = scmp.ne.s32.totalorder %s105, %s121
    %p123 = scmp.eq.s32.totalorder %s20, 0
    %p124 = por %p122, %p123
    %s125 = sadd.s32 %s22, %s23
    %s126 = sadd.s32 %s36, %s32
    %s127 = ssub.s32 %s21, %s40
    %s128 = ssub.s32 %s125, %s126
    %s129 = sor.u32 %s127, %s128
    %p130 = scmp.eq.s32.totalorder %s129, 0
    %s132 = sadd.s32 %s131, 1
    %s133 = scalar_select %p130, %s131, %s132
    %p136 = pneg %p130
    %p137 = scmp.eq.s32.totalorder %s14, 3
    %p138 = por %p136, %p137
    %p139 = scmp.ne.s32.totalorder %s131, %s134
    %p140 = scmp.eq.s32.totalorder %s14, 0
    %p141 = por %p139, %p140
    %p142 = scmp.ne.s32.totalorder %s131, %s134
    %p143 = scmp.eq.s32.totalorder %s19, 3
    %p144 = por %p142, %p143
    %p145 = scmp.ne.s32.totalorder %s134, %s135
    %p146 = scmp.eq.s32.totalorder %s19, 0
    %p147 = por %p145, %p146
    %p148 = scmp.ne.s32.totalorder %s134, %s135
    %p149 = scmp.eq.s32.totalorder %s20, 3
    %p150 = por %p148, %p149
    %p152 = scmp.ne.s32.totalorder %s135, %s151
    %p153 = scmp.eq.s32.totalorder %s20, 0
    %p154 = por %p152, %p153
    %s155 = sadd.s32 %s22, %s23
    %s156 = sadd.s32 %s36, %s32
    %s157 = ssub.s32 %s21, %s40
    %s158 = ssub.s32 %s155, %s156
    %s159 = sor.u32 %s157, %s158
    %p160 = scmp.eq.s32.totalorder %s159, 0
    %s162 = sadd.s32 %s161, 1
    %s163 = scalar_select %p160, %s161, %s162
    %p166 = pneg %p160
    %p167 = scmp.eq.s32.totalorder %s14, 3
    %p168 = por %p166, %p167
    %p169 = scmp.ne.s32.totalorder %s161, %s164
    %p170 = scmp.eq.s32.totalorder %s14, 0
    %p171 = por %p169, %p170
    %p172 = scmp.ne.s32.totalorder %s161, %s164
    %p173 = scmp.eq.s32.totalorder %s19, 3
    %p174 = por %p172, %p173
    %p175 = scmp.ne.s32.totalorder %s164, %s165
    %p176 = scmp.eq.s32.totalorder %s19, 0
    %p177 = por %p175, %p176
    %p178 = scmp.ne.s32.totalorder %s164, %s165
    %p179 = scmp.eq.s32.totalorder %s20, 3
    %p180 = por %p178, %p179
    %p182 = scmp.ne.s32.totalorder %s165, %s181
    %p183 = scmp.eq.s32.totalorder %s20, 0
    %p184 = por %p182, %p183
    %s185 = ssub.s32 %s21, %s40
    %s186 = ssub.s32 %s22, %s36
    %s187 = sor.u32 %s185, %s186
    %p188 = scmp.eq.s32.totalorder %s187, 0
    %s190 = sadd.s32 %s189, 1
    %s191 = scalar_select %p188, %s189, %s190
    %p194 = pneg %p188
    %p195 = scmp.eq.s32.totalorder %s14, 3
    %p196 = por %p194, %p195
    %p197 = scmp.ne.s32.totalorder %s189, %s192
    %p198 = scmp.eq.s32.totalorder %s14, 0
    %p199 = por %p197, %p198
    %p200 = scmp.ne.s32.totalorder %s189, %s192
    %p201 = scmp.eq.s32.totalorder %s19, 3
    %p202 = por %p200, %p201
    %p203 = scmp.ne.s32.totalorder %s192, %s193
    %p204 = scmp.eq.s32.totalorder %s19, 0
    %p205 = por %p203, %p204
    %p206 = scmp.ne.s32.totalorder %s192, %s193
    %p207 = scmp.eq.s32.totalorder %s20, 3
    %p208 = por %p206, %p207
    %p210 = scmp.ne.s32.totalorder %s193, %s209
    %p211 = scmp.eq.s32.totalorder %s20, 0
    %p212 = por %p210, %p211
    %s213 = ssub.s32 %s21, %s40
    %s214 = ssub.s32 %s22, %s36
    %s215 = sor.u32 %s213, %s214
    %p216 = scmp.eq.s32.totalorder %s215, 0
    %s218 = sadd.s32 %s217, 1
    %s219 = scalar_select %p216, %s217, %s218
    %p222 = pneg %p216
    %p223 = scmp.eq.s32.totalorder %s14, 3
    %p224 = por %p222, %p223
    %p225 = scmp.ne.s32.totalorder %s217, %s220
    %p226 = scmp.eq.s32.totalorder %s14, 0
    %p227 = por %p225, %p226
    %p228 = scmp.ne.s32.totalorder %s217, %s220
    %p229 = scmp.eq.s32.totalorder %s19, 3
    %p230 = por %p228, %p229
    %p231 = scmp.ne.s32.totalorder %s220, %s221
    %p232 = scmp.eq.s32.totalorder %s19, 0
    %p233 = por %p231, %p232
    %p234 = scmp.ne.s32.totalorder %s220, %s221
    %p235 = scmp.eq.s32.totalorder %s20, 3
    %p236 = por %p234, %p235
    %p238 = scmp.ne.s32.totalorder %s221, %s237
    %p239 = scmp.eq.s32.totalorder %s20, 0
    %p240 = por %p238, %p239
    %s241 = ssub.s32 %s21, %s40
    %s242 = ssub.s32 %s22, %s36
    %s243 = sor.u32 %s241, %s242
    %p244 = scmp.eq.s32.totalorder %s243, 0
    %s246 = sadd.s32 %s245, 1
    %s247 = scalar_select %p244, %s245, %s246
    %p250 = pneg %p244
    %p251 = scmp.eq.s32.totalorder %s14, 3
    %p252 = por %p250, %p251
    %p253 = scmp.ne.s32.totalorder %s245, %s248
    %p254 = scmp.eq.s32.totalorder %s14, 0
    %p255 = por %p253, %p254
    %p256 = scmp.ne.s32.totalorder %s245, %s248
    %p257 = scmp.eq.s32.totalorder %s19, 3
    %p258 = por %p256, %p257
    %p259 = scmp.ne.s32.totalorder %s248, %s249
    %p260 = scmp.eq.s32.totalorder %s19, 0
    %p261 = por %p259, %p260
    %p262 = scmp.ne.s32.totalorder %s248, %s249
    %p263 = scmp.eq.s32.totalorder %s20, 3
    %p264 = por %p262, %p263
    %p266 = scmp.ne.s32.totalorder %s249, %s265
    %p267 = scmp.eq.s32.totalorder %s20, 0
    %p268 = por %p266, %p267
    %p269 = scmp.le.s32.totalorder 1, %s14
    %p270 = scmp.lt.s32.totalorder %s14, 5
    %p271 = pnand %p269, %p270
    %p272 = pneg %p271
    // Predicated region
    $region9: #{learnable_vq_forward.1} parent=5 // pred_check
      _
    $region10: #{learnable_vq_forward.1} parent=5 // pred_check_branch
      %274 = sbr.rel (%p271) target = $region12
    $region11: #{learnable_vq_forward.1} parent=5 // pred_region
      %s275 = ssub.s32 %s14, 1
      // Predicated region
      $region13: #{learnable_vq_forward.1} parent=11 // pred_check
        %p276 = pneg %p117
      $region14: #{learnable_vq_forward.1} parent=11 // pred_check_branch
        %278 = sbr.rel (%p276) target = $region16
      $region15: #{learnable_vq_forward.1} parent=11 // pred_region
        %s279 = sadd.s32 %s25, %s26
        %p280 = scmp.lt.s32.totalorder %s279, 0
        %s281 = scalar_select %p280, %s279, 0
        %s282 = scalar_lea.vmem %s2, %s281
        %s283 = sadd.s32 %s25, %s26
      $region16: #{learnable_vq_forward.1} parent=11 // pred_fallthru
        _
    $region12: #{learnable_vq_forward.1} parent=5 // pred_fallthru
      _
    %p284 = scmp.lt.s32.totalorder %s14, 4
    // Predicated region
    $region17: #{learnable_vq_forward.1} parent=5 // pred_check
      %p285 = pneg %p284
    $region18: #{learnable_vq_forward.1} parent=5 // pred_check_branch
      %287 = sbr.rel (%p285) target = $region20
    $region19: #{learnable_vq_forward.1} parent=5 // pred_region
      // Predicated region
      $region21: #{learnable_vq_forward.1} parent=19 // pred_check
        %p288 = pneg %p57
      $region22: #{learnable_vq_forward.1} parent=19 // pred_check_branch
        %290 = sbr.rel (%p288) target = $region24
      $region23: #{learnable_vq_forward.1} parent=19 // pred_region
        %s291 = sadd.s32 %s22, %s23
        %p292 = scmp.lt.s32.totalorder %s21, 3
        %s293 = scalar_select %p292, %s21, 3
        %p294 = scmp.lt.s32.totalorder %s291, 0
        %s295 = scalar_select %p294, %s291, 0
        %s296 = smul.addr %s293, 4
        %s297 = sadd.s32 %s295, %s296
        %s298 = smul.addr %s297, 4
        %s299 = scalar_lea.vmem %s0, %s298
        %s300 = sadd.s32 %s22, %s23
      $region24: #{learnable_vq_forward.1} parent=19 // pred_fallthru
        _
      // Predicated region
      $region25: #{learnable_vq_forward.1} parent=19 // pred_check
        %p301 = pneg %p83
      $region26: #{learnable_vq_forward.1} parent=19 // pred_check_branch
        %303 = sbr.rel (%p301) target = $region28
      $region27: #{learnable_vq_forward.1} parent=19 // pred_region
        %p304 = scmp.lt.s32.totalorder %s21, 3
        %s305 = scalar_select %p304, %s21, 3
        %s306 = smul.addr %s305, 2
        %s307 = smul.addr %s306, 4
        %s308 = scalar_lea.vmem %s1, %s307
      $region28: #{learnable_vq_forward.1} parent=19 // pred_fallthru
        _
    $region20: #{learnable_vq_forward.1} parent=5 // pred_fallthru
      _
    %p309 = scmp.le.s32.totalorder 1, %s14
    %p310 = scmp.lt.s32.totalorder %s14, 5
    %p311 = pnand %p309, %p310
    %p312 = pneg %p311
    // Predicated region
    $region29: #{learnable_vq_forward.1} parent=5 // pred_check
      _
    $region30: #{learnable_vq_forward.1} parent=5 // pred_check_branch
      %314 = sbr.rel (%p311) target = $region32
    $region31: #{learnable_vq_forward.1} parent=5 // pred_region
      %s315 = ssub.s32 %s14, 1
      %s316 = sadd.s32 %s25, %s26
      %p317 = scmp.lt.s32.totalorder %s24, 3
      %s318 = scalar_select %p317, %s24, 3
      %p319 = scmp.lt.s32.totalorder %s316, 0
      %s320 = scalar_select %p319, %s316, 0
      %s321 = smul.addr %s318, 4
      %s322 = sadd.s32 %s320, %s321
      %s323 = smul.addr %s322, 4
      %s324 = scalar_lea.vmem %s0, %s323
      %p325 = pneg %p63
      %p326 = pneg %p60
      %p327 = scmp.lt.s32.totalorder %s24, 3
      %s328 = scalar_select %p327, %s24, 3
      %s329 = smul.addr %s328, 2
      %s330 = smul.addr %s329, 4
      %s331 = scalar_lea.vmem %s1, %s330
      %p332 = pneg %p89
      %p333 = pneg %p86
      %s334 = sadd.s32 %s25, %s26
      %p335 = scmp.lt.s32.totalorder %s334, 0
      %s336 = scalar_select %p335, %s334, 0
      %s337 = scalar_lea.vmem %s2, %s336
      %p338 = pneg %p117
      %p339 = pneg %p114
      %p340 = pneg %p147
      %p341 = pneg %p144
      %s342 = sadd.s32 %s25, %s26
      %p343 = scmp.lt.s32.totalorder %s24, 3
      %s344 = scalar_select %p343, %s24, 3
      %p345 = scmp.lt.s32.totalorder %s342, 0
      %s346 = scalar_select %p345, %s342, 0
      %s347 = smul.addr %s344, 4
      %s348 = sadd.s32 %s346, %s347
      %s349 = smul.addr %s348, 4
      %s350 = scalar_lea.vmem %s3, %s349
      %p351 = pneg %p177
      %p352 = pneg %p174
      %s353 = sadd.s32 %s25, %s26
      %p354 = scmp.lt.s32.totalorder %s24, 3
      %s355 = scalar_select %p354, %s24, 3
      %p356 = scmp.lt.s32.totalorder %s353, 0
      %s357 = scalar_select %p356, %s353, 0
      %s358 = sadd.s32 %s357, %s355
      %s359 = scalar_lea.vmem %s4, %s358
      %p360 = pneg %p205
      %p361 = pneg %p202
      %p362 = scmp.lt.s32.totalorder %s24, 3
      %s363 = scalar_select %p362, %s24, 3
      %p364 = scmp.lt.s32.totalorder %s25, 0
      %s365 = scalar_select %p364, %s25, 0
      %s366 = sadd.s32 %s365, %s363
      %s367 = scalar_lea.vmem %s5, %s366
      %p368 = pneg %p233
      %p369 = pneg %p230
      %p370 = scmp.lt.s32.totalorder %s24, 3
      %s371 = scalar_select %p370, %s24, 3
      %p372 = scmp.lt.s32.totalorder %s25, 0
      %s373 = scalar_select %p372, %s25, 0
      %s374 = smul.addr %s373, 2
      %s375 = smul.addr %s371, 2
      %s376 = sadd.s32 %s374, %s375
      %s377 = smul.addr %s376, 8
      %s378 = scalar_lea.vmem %s6, %s377
      %p379 = pneg %p261
      %p380 = pneg %p258
      %p381 = scmp.lt.s32.totalorder %s24, 3
      %s382 = scalar_select %p381, %s24, 3
      %p383 = scmp.lt.s32.totalorder %s25, 0
      %s384 = scalar_select %p383, %s25, 0
      %s385 = smul.addr %s384, 2
      %s386 = smul.addr %s382, 2
      %s387 = sadd.s32 %s385, %s386
      %s388 = smul.addr %s387, 8
      %s389 = scalar_lea.vmem %s7, %s388
      %s390 = sadd.s32 %s25, %s26
      %p391 = scmp.lt.s32.totalorder %s24, 3
      %s392 = scalar_select %p391, %s24, 3
      %p393 = scmp.lt.s32.totalorder %s390, 0
      %s394 = scalar_select %p393, %s390, 0
      %s395 = smul.addr %s392, 4
      %s396 = sadd.s32 %s394, %s395
      %s397 = smul.addr %s396, 4
      %s398 = scalar_lea.vmem %s0, %s397
      %s399 = sadd.s32 %s25, %s26
      %p400 = scmp.lt.s32.totalorder %s24, 3
      %s401 = scalar_select %p400, %s24, 3
      %s402 = smul.addr %s401, 2
      %s403 = smul.addr %s402, 4
      %s404 = scalar_lea.vmem %s1, %s403
      %s405 = sadd.s32 %s25, %s26
      %p406 = scmp.lt.s32.totalorder %s405, 0
      %s407 = scalar_select %p406, %s405, 0
      %s408 = scalar_lea.vmem %s2, %s407
      %s409 = sadd.s32 %s25, %s26
      %s410 = sadd.s32 %s25, %s26
      %p411 = scmp.lt.s32.totalorder %s24, 3
      %s412 = scalar_select %p411, %s24, 3
      %p413 = scmp.lt.s32.totalorder %s410, 0
      %s414 = scalar_select %p413, %s410, 0
      %s415 = smul.addr %s412, 4
      %s416 = sadd.s32 %s414, %s415
      %s417 = smul.addr %s416, 4
      %s418 = scalar_lea.vmem %s3, %s417
      %s419 = sadd.s32 %s25, %s26
      %s420 = sadd.s32 %s25, %s26
      %p421 = scmp.lt.s32.totalorder %s24, 3
      %s422 = scalar_select %p421, %s24, 3
      %p423 = scmp.lt.s32.totalorder %s420, 0
      %s424 = scalar_select %p423, %s420, 0
      %s425 = sadd.s32 %s424, %s422
      %s426 = scalar_lea.vmem %s4, %s425
      %s427 = sadd.s32 %s25, %s26
      %p428 = scmp.lt.s32.totalorder %s24, 3
      %s429 = scalar_select %p428, %s24, 3
      %p430 = scmp.lt.s32.totalorder %s25, 0
      %s431 = scalar_select %p430, %s25, 0
      %s432 = sadd.s32 %s431, %s429
      %s433 = scalar_lea.vmem %s5, %s432
      %p434 = scmp.lt.s32.totalorder %s24, 3
      %s435 = scalar_select %p434, %s24, 3
      %p436 = scmp.lt.s32.totalorder %s25, 0
      %s437 = scalar_select %p436, %s25, 0
      %s438 = smul.addr %s437, 2
      %s439 = smul.addr %s435, 2
      %s440 = sadd.s32 %s438, %s439
      %s441 = smul.addr %s440, 8
      %s442 = scalar_lea.vmem %s6, %s441
      %p443 = scmp.lt.s32.totalorder %s24, 3
      %s444 = scalar_select %p443, %s24, 3
      %p445 = scmp.lt.s32.totalorder %s25, 0
      %s446 = scalar_select %p445, %s25, 0
      %s447 = smul.addr %s446, 2
      %s448 = smul.addr %s444, 2
      %s449 = sadd.s32 %s447, %s448
      %s450 = smul.addr %s449, 8
      %s451 = scalar_lea.vmem %s7, %s450
      %v453 = vld [vmem:[%s398] sm:$0xf]
      %v454 = vld [vmem:[%s398 + $0x4] sm:$0xf]
      %v455 = vld [vmem:[%s398 + $0x8] sm:$0xf]
      %v456 = vld [vmem:[%s398 + $0xc] sm:$0xf]
      %v457 = vld [vmem:[%s404] sm:$0xf]
      %v458 = vld [vmem:[%s404 + $0x4] sm:$0xf]
      %p459 = scmp.eq.s32.totalorder %s26, 0
      // Predicated region
      $region33: #{learnable_vq_forward.1} parent=31 // pred_check
        %p460 = pneg %p459
      $region34: #{learnable_vq_forward.1} parent=31 // pred_check_branch
        %462 = sbr.rel (%p460) target = $region36
      $region35: #{learnable_vq_forward.1} parent=31 // pred_region
        %v463 = vunpack.c.l.bf16 %v457
        %v464 = vunpack.c.l.bf16 %v458
        %v465 = vmul.f32 %v463, %v463
        %v466 = vmul.f32 %v464, %v464
        %vm467 = vcmask 261120
        %v468 = vsel %vm467, %v465, 0.0
        %469 = vadd.xlane.f32.xlu0 %v468
        %v470 = vpop.xlane.xlu0 %469
        %v471 = vsel %vm467, %v466, 0.0
        %472 = vadd.xlane.f32.xlu0 %v471
        %v473 = vpop.xlane.xlu0 %472
        %vm474 = vcmask 7168
        %475 = vst.msk [vmem:[#allocation2] sm:$0xff] %vm474, %v470
        %476 = vst.msk [vmem:[#allocation2 + $0x8] sm:$0xff] %vm474, %v473
        %vm477 = vcmask 0
        %478 = vst.msk [vmem:[%s433] sm:$0x1] %vm477, 0.0
        %479 = vst.msk [vmem:[%s442] sm:$0xff] %vm467, 0.0
        %480 = vst.msk [vmem:[%s442 + $0x8] sm:$0xff] %vm467, 0.0
        %481 = vst.msk [vmem:[%s451] sm:$0xff] %vm474, 0.0
        %482 = vst.msk [vmem:[%s451 + $0x8] sm:$0xff] %vm474, 0.0
      $region36: #{learnable_vq_forward.1} parent=31 // pred_fallthru
        _
      %v485 = vunpack.c.l.b16 %v457
      %v486 = vunpack.c.l.b16 %v458
      %v487 = vpack.c.b16 %v486, %v485
      %v492 = vunpack.c.l.b16 %v453
      %v493 = vunpack.c.l.b16 %v454
      %v494 = vunpack.c.l.b16 %v455
      %v495 = vunpack.c.l.b16 %v456
      %v496 = vpack.c.b16 %v493, %v492
      %v497 = vpack.c.b16 %v495, %v494
      %vm500 = vcmask 261120
      %v502 = vsel %vm500, %v487, 0
      %504 = vmatpush.bf16.msra.mxu0 0
      %505 = vmatpush.bf16.msra.mxu0 0
      %506 = vmatpush.bf16.msra.mxu0 0
      %507 = vmatpush.bf16.msra.mxu0 0
      %508 = vmatpush.bf16.msra.mxu0 0
      %509 = vmatpush.bf16.msra.mxu0 0
      %510 = vmatpush.bf16.msra.mxu0 %v497
      %511 = vmatpush.bf16.msra.mxu0 %v496
      %512 = vmatmul.bf16.gmra.mxu0 %v502
      %v513 = vpop.f32.mrf.mxu0
      %v514 = vadd.f32 0.0, %v513
      %v515 = vpop.f32.mrf.mxu0
      %v516 = vadd.f32 0.0, %v515
      %517 = vdwg.mxu0
      %v518 = vld [vmem:[#allocation2] sm:$0xff]
      %v519 = vld [vmem:[#allocation2 + $0x8] sm:$0xff]
      %v520 = vmul.f32 %v514, 2.0
      %v521 = vmul.f32 %v516, 2.0
      %523 = vset.pattern.permute.xlu0 0
      %524 = vperm.xlu0 %523, %v518
      %v525 = vpop.permute.xlu0 %524
      %528 = vset.pattern.permute.xlu0 0
      %529 = vperm.xlu0 %528, %v519
      %v530 = vpop.permute.xlu0 %529
      %v532 = vsub.f32 %v525, %v520
      %v533 = vsub.f32 %v530, %v521
      %v534 = vlaneseq
      %v535 = vshrl.u32 %v534, 7
      %v536 = vadd.s32 %v535, 8
      %vm537 = vcmask 130048
      %v538 = vsel %vm537, %v532, inf
      %v539 = vsel %vm537, %v533, inf
      %v540 = vmin.f32 %v538, %v539
      %v541 = vrot.slane %v540, 4
      %v542 = vmin.f32 %v540, %v541
      %v543 = vrot.slane %v542, 2
      %v544 = vmin.f32 %v542, %v543
      %v545 = vrot.slane %v544, 1
      %v546 = vmin.f32 %v544, %v545
      %vm547 = vcmp.eq.f32.partialorder %v532, %v546
      %vm548 = vcmp.eq.f32.partialorder %v533, %v546
      %v549 = vcvt.s32.f32 %v535
      %v550 = vcvt.s32.f32 %v536
      %v551 = vsel %vm547, %v549, 16.0
      %v552 = vsel %vm548, %v550, 16.0
      %v553 = vsel %vm537, %v551, inf
      %v554 = vsel %vm537, %v552, inf
      %v555 = vmin.f32 %v553, %v554
      %v556 = vrot.slane %v555, 4
      %v557 = vmin.f32 %v555, %v556
      %v558 = vrot.slane %v557, 2
      %v559 = vmin.f32 %v557, %v558
      %v560 = vrot.slane %v559, 1
      %v561 = vmin.f32 %v559, %v560
      %v562 = vcvt.f32.s32.to.zero.pseudo %v561
      %vm563 = vcmask 122880
      %564 = vst.msk [vmem:[%s426] sm:$0x1] %vm563, %v562
      %vm565 = vcmp.eq.s32.totalorder %v535, %v562
      %vm566 = vcmp.eq.s32.totalorder %v536, %v562
      %v567 = vsel %vm565, 1, 0
      %v568 = vsel %vm566, 1, 0
      %v569 = vcvt.s32.f32 %v567
      %v570 = vcvt.s32.f32 %v568
      %v571 = vpack.c.bf16 %v569, %v569
      %v572 = vpack.c.bf16 %v570, %v570
      %574 = vxpose.xlu0.c.b16.start [1/8] %v487, 128
      %575 = vxpose.xlu0.c.b16.cont [2/8] 0, 128
      %576 = vxpose.xlu0.c.b16.cont [3/8] 0, 128
      %577 = vxpose.xlu0.c.b16.cont [4/8] 0, 128
      %578 = vxpose.xlu0.c.b16.cont [5/8] 0, 128
      %579 = vxpose.xlu0.c.b16.cont [6/8] 0, 128
      %580 = vxpose.xlu0.c.b16.cont [7/8] 0, 128
      %581 = vxpose.xlu0.c.b16.end [8/8] 0, 128
      %v582 = vpop.trf.xlu0
      %v583 = vpop.trf.xlu0
      %v584 = vpop.trf.xlu0
      %v585 = vpop.trf.xlu0
      %v586 = vpop.trf.xlu0
      %v587 = vpop.trf.xlu0
      %v588 = vpop.trf.xlu0
      %v589 = vpop.trf.xlu0
      %v592 = vunpack.c.l.b16 %v571
      %v593 = vunpack.c.l.b16 %v572
      %v594 = vpack.c.b16 %v593, %v592
      %v597 = vsel %vm537, %v582, 0
      %v600 = vsel %vm537, %v583, 0
      %602 = vmatpush.bf16.msra.mxu0 0
      %603 = vmatpush.bf16.msra.mxu0 0
      %604 = vmatpush.bf16.msra.mxu0 0
      %605 = vmatpush.bf16.msra.mxu0 0
      %606 = vmatpush.bf16.msra.mxu0 0
      %607 = vmatpush.bf16.msra.mxu0 0
      %608 = vmatpush.bf16.msra.mxu0 0
      %609 = vmatpush.bf16.msra.mxu0 %v594
      %610 = vmatmul.bf16.gmra.mxu0 %v597
      %v611 = vpop.f32.mrf.mxu0
      %v612 = vadd.f32 0.0, %v611
      %v613 = vpop.f32.mrf.mxu0
      %v614 = vadd.f32 0.0, %v613
      %615 = vmatmul.bf16.gmra.mxu0 %v600
      %v616 = vpop.f32.mrf.mxu0
      %v617 = vadd.f32 0.0, %v616
      %v618 = vpop.f32.mrf.mxu0
      %v619 = vadd.f32 0.0, %v618
      %620 = vdwg.mxu0
      %v621 = vpack.c.bf16 %v612, %v612
      %v622 = vpack.c.bf16 %v614, %v614
      %v623 = vpack.c.bf16 %v617, %v617
      %v624 = vpack.c.bf16 %v619, %v619
      %vm625 = vcmask 125952
      %626 = vst.msk [vmem:[%s418] sm:$0xf] %vm625, %v621
      %627 = vst.msk [vmem:[%s418 + $0x4] sm:$0xf] %vm625, %v622
      %628 = vst.msk [vmem:[%s418 + $0x8] sm:$0xf] %vm625, %v623
      %629 = vst.msk [vmem:[%s418 + $0xc] sm:$0xf] %vm625, %v624
      %v630 = vld [vmem:[%s408] sm:$0x1]
      %v631 = vunpack.c.l.bf16 %v453
      %v632 = vunpack.c.l.bf16 %v454
      %v633 = vunpack.c.l.bf16 %v455
      %v634 = vunpack.c.l.bf16 %v456
      %v635 = vmul.f32 %v631, %v631
      %v636 = vmul.f32 %v632, %v632
      %v637 = vmul.f32 %v633, %v633
      %v638 = vmul.f32 %v634, %v634
      %v639 = vsel %vm537, %v635, 0.0
      %v640 = vsel %vm537, %v636, 0.0
      %v641 = vadd.f32 %v639, %v640
      %v642 = vsel %vm537, %v637, 0.0
      %v643 = vadd.f32 %v641, %v642
      %v644 = vsel %vm537, %v638, 0.0
      %v645 = vadd.f32 %v643, %v644
      %v646 = vrot.slane %v645, 4
      %v647 = vadd.f32 %v645, %v646
      %v648 = vrot.slane %v647, 2
      %v649 = vadd.f32 %v647, %v648
      %v650 = vrot.slane %v649, 1
      %v651 = vadd.f32 %v649, %v650
      %v652 = vadd.f32 %v651, %v546
      %v653 = vmax.f32 %v652, 0.0
      %v654 = vld [vmem:[%s433] sm:$0x1]
      %v655 = vmul.f32 %v630, %v653
      %v656 = vsel %vm563, %v655, 0.0
      %657 = vadd.xlane.f32.xlu0 %v656
      %v658 = vpop.xlane.xlu0 %657
      %v659 = vadd.f32 %v654, %v658
      %vm660 = vcmask 0
      %661 = vst.msk [vmem:[%s433] sm:$0x1] %vm660, %v659
      %v662 = vpack.c.bf16 %v630, %v630
      %v664 = vpack.i.b16 %v662, %v662
      %v666 = vperm.slane %v664, 0
      %v667 = vunpack.c.l.bf16 %v571
      %v668 = vunpack.c.l.bf16 %v572
      %v669 = vunpack.c.l.bf16 %v666
      %v670 = vmul.f32 %v667, %v669
      %v671 = vmul.f32 %v668, %v669
      %v672 = vpack.c.bf16 %v671, %v670
      %v673 = vld [vmem:[%s442] sm:$0xff]
      %v674 = vld [vmem:[%s442 + $0x8] sm:$0xff]
      %v676 = vsel %vm537, %v672, 0
      %v679 = vsel %vm537, %v496, 0
      %v682 = vsel %vm537, %v497, 0
      %684 = vmatpush.bf16.xpose.msra.mxu0 0
      %685 = vmatpush.bf16.xpose.msra.mxu0 0
      %686 = vmatpush.bf16.xpose.msra.mxu0 0
      %687 = vmatpush.bf16.xpose.msra.mxu0 0
      %688 = vmatpush.bf16.xpose.msra.mxu0 0
      %689 = vmatpush.bf16.xpose.msra.mxu0 0
      %690 = vmatpush.bf16.xpose.msra.mxu0 %v682
      %691 = vmatpush.bf16.xpose.msra.mxu0 %v679
      %692 = vmatmul.bf16.gmra.mxu0 %v676
      %v693 = vpop.f32.mrf.mxu0
      %v694 = vadd.f32 0.0, %v693
      %v695 = vpop.f32.mrf.mxu0
      %v696 = vadd.f32 0.0, %v695
      %697 = vdwg.mxu0
      %v698 = vadd.f32 %v673, %v694
      %v699 = vadd.f32 %v674, %v696
      %700 = vst.msk [vmem:[%s442] sm:$0xff] %vm500, %v698
      %701 = vst.msk [vmem:[%s442 + $0x8] sm:$0xff] %vm500, %v699
      %v702 = vld [vmem:[%s451] sm:$0xff]
      %v703 = vld [vmem:[%s451 + $0x8] sm:$0xff]
      %v704 = vunpack.c.l.bf16 %v672
      %v705 = vunpack.c.h.bf16 %v672
      %v706 = vsel %vm537, %v704, 0.0
      %707 = vadd.xlane.f32.xlu0 %v706
      %v708 = vpop.xlane.xlu0 %707
      %v709 = vsel %vm537, %v705, 0.0
      %710 = vadd.xlane.f32.xlu0 %v709
      %v711 = vpop.xlane.xlu0 %710
      %v712 = vadd.f32 %v702, %v708
      %v713 = vadd.f32 %v703, %v711
      %vm714 = vcmask 7168
      %715 = vst.msk [vmem:[%s451] sm:$0xff] %vm714, %v712
      %716 = vst.msk [vmem:[%s451 + $0x8] sm:$0xff] %vm714, %v713
      %s717 = sadd.s32 %s25, %s26
      %p718 = scmp.lt.s32.totalorder %s24, 3
      %s719 = scalar_select %p718, %s24, 3
      %p720 = scmp.lt.s32.totalorder %s717, 0
      %s721 = scalar_select %p720, %s717, 0
      %s722 = smul.addr %s719, 4
      %s723 = sadd.s32 %s721, %s722
      %s724 = smul.addr %s723, 4
      %s725 = scalar_lea.vmem %s3, %s724
      %s726 = sadd.s32 %s25, %s26
      %p727 = scmp.lt.s32.totalorder %s24, 3
      %s728 = scalar_select %p727, %s24, 3
      %p729 = scmp.lt.s32.totalorder %s726, 0
      %s730 = scalar_select %p729, %s726, 0
      %s731 = sadd.s32 %s730, %s728
      %s732 = scalar_lea.vmem %s4, %s731
      %p733 = scmp.lt.s32.totalorder %s24, 3
      %s734 = scalar_select %p733, %s24, 3
      %p735 = scmp.lt.s32.totalorder %s25, 0
      %s736 = scalar_select %p735, %s25, 0
      %s737 = sadd.s32 %s736, %s734
      %s738 = scalar_lea.vmem %s5, %s737
      %p739 = scmp.lt.s32.totalorder %s24, 3
      %s740 = scalar_select %p739, %s24, 3
      %p741 = scmp.lt.s32.totalorder %s25, 0
      %s742 = scalar_select %p741, %s25, 0
      %s743 = smul.addr %s742, 2
      %s744 = smul.addr %s740, 2
      %s745 = sadd.s32 %s743, %s744
      %s746 = smul.addr %s745, 8
      %s747 = scalar_lea.vmem %s6, %s746
      %p748 = scmp.lt.s32.totalorder %s24, 3
      %s749 = scalar_select %p748, %s24, 3
      %p750 = scmp.lt.s32.totalorder %s25, 0
      %s751 = scalar_select %p750, %s25, 0
      %s752 = smul.addr %s751, 2
      %s753 = smul.addr %s749, 2
      %s754 = sadd.s32 %s752, %s753
      %s755 = smul.addr %s754, 8
      %s756 = scalar_lea.vmem %s7, %s755
      // Predicated region
      $region37: #{learnable_vq_forward.1} parent=31 // pred_check
        %p757 = pneg %p144
      $region38: #{learnable_vq_forward.1} parent=31 // pred_check_branch
        %759 = sbr.rel (%p757) target = $region40
      $region39: #{learnable_vq_forward.1} parent=31 // pred_region
        %s760 = sadd.s32 %s25, %s26
      $region40: #{learnable_vq_forward.1} parent=31 // pred_fallthru
        _
      // Predicated region
      $region41: #{learnable_vq_forward.1} parent=31 // pred_check
        %p761 = pneg %p174
      $region42: #{learnable_vq_forward.1} parent=31 // pred_check_branch
        %763 = sbr.rel (%p761) target = $region44
      $region43: #{learnable_vq_forward.1} parent=31 // pred_region
        %s764 = sadd.s32 %s25, %s26
      $region44: #{learnable_vq_forward.1} parent=31 // pred_fallthru
        _
      // Predicated region
      $region45: #{learnable_vq_forward.1} parent=31 // pred_check
        %p765 = pneg %p202
      $region46: #{learnable_vq_forward.1} parent=31 // pred_check_branch
        %767 = sbr.rel (%p765) target = $region48
      $region47: #{learnable_vq_forward.1} parent=31 // pred_region
        _
      $region48: #{learnable_vq_forward.1} parent=31 // pred_fallthru
        _
      // Predicated region
      $region49: #{learnable_vq_forward.1} parent=31 // pred_check
        %p768 = pneg %p230
      $region50: #{learnable_vq_forward.1} parent=31 // pred_check_branch
        %770 = sbr.rel (%p768) target = $region52
      $region51: #{learnable_vq_forward.1} parent=31 // pred_region
        _
      $region52: #{learnable_vq_forward.1} parent=31 // pred_fallthru
        _
      // Predicated region
      $region53: #{learnable_vq_forward.1} parent=31 // pred_check
        %p771 = pneg %p258
      $region54: #{learnable_vq_forward.1} parent=31 // pred_check_branch
        %773 = sbr.rel (%p771) target = $region56
      $region55: #{learnable_vq_forward.1} parent=31 // pred_region
        _
      $region56: #{learnable_vq_forward.1} parent=31 // pred_fallthru
        _
    $region32: #{learnable_vq_forward.1} parent=5 // pred_fallthru
      _
    %p774 = scmp.le.s32.totalorder 2, %s14
    // Predicated region
    $region57: #{learnable_vq_forward.1} parent=5 // pred_check
      %p775 = pneg %p774
    $region58: #{learnable_vq_forward.1} parent=5 // pred_check_branch
      %777 = sbr.rel (%p775) target = $region60
    $region59: #{learnable_vq_forward.1} parent=5 // pred_region
      %s778 = ssub.s32 %s14, 2
      // Predicated region
      $region61: #{learnable_vq_forward.1} parent=59 // pred_check
        %p779 = pneg %p150
      $region62: #{learnable_vq_forward.1} parent=59 // pred_check_branch
        %781 = sbr.rel (%p779) target = $region64
      $region63: #{learnable_vq_forward.1} parent=59 // pred_region
        %s782 = sadd.s32 %s28, %s29
        %p783 = scmp.lt.s32.totalorder %s27, 3
        %s784 = scalar_select %p783, %s27, 3
        %p785 = scmp.lt.s32.totalorder %s782, 0
        %s786 = scalar_select %p785, %s782, 0
        %s787 = smul.addr %s784, 4
        %s788 = sadd.s32 %s786, %s787
        %s789 = smul.addr %s788, 4
        %s790 = scalar_lea.vmem %s3, %s789
      $region64: #{learnable_vq_forward.1} parent=59 // pred_fallthru
        _
      // Predicated region
      $region65: #{learnable_vq_forward.1} parent=59 // pred_check
        %p791 = pneg %p180
      $region66: #{learnable_vq_forward.1} parent=59 // pred_check_branch
        %793 = sbr.rel (%p791) target = $region68
      $region67: #{learnable_vq_forward.1} parent=59 // pred_region
        %s794 = sadd.s32 %s28, %s29
        %p795 = scmp.lt.s32.totalorder %s27, 3
        %s796 = scalar_select %p795, %s27, 3
        %p797 = scmp.lt.s32.totalorder %s794, 0
        %s798 = scalar_select %p797, %s794, 0
        %s799 = sadd.s32 %s798, %s796
        %s800 = scalar_lea.vmem %s4, %s799
      $region68: #{learnable_vq_forward.1} parent=59 // pred_fallthru
        _
      // Predicated region
      $region69: #{learnable_vq_forward.1} parent=59 // pred_check
        %p801 = pneg %p208
      $region70: #{learnable_vq_forward.1} parent=59 // pred_check_branch
        %803 = sbr.rel (%p801) target = $region72
      $region71: #{learnable_vq_forward.1} parent=59 // pred_region
        %p804 = scmp.lt.s32.totalorder %s27, 3
        %s805 = scalar_select %p804, %s27, 3
        %p806 = scmp.lt.s32.totalorder %s28, 0
        %s807 = scalar_select %p806, %s28, 0
        %s808 = sadd.s32 %s807, %s805
        %s809 = scalar_lea.vmem %s5, %s808
      $region72: #{learnable_vq_forward.1} parent=59 // pred_fallthru
        _
      // Predicated region
      $region73: #{learnable_vq_forward.1} parent=59 // pred_check
        %p810 = pneg %p236
      $region74: #{learnable_vq_forward.1} parent=59 // pred_check_branch
        %812 = sbr.rel (%p810) target = $region76
      $region75: #{learnable_vq_forward.1} parent=59 // pred_region
        %p813 = scmp.lt.s32.totalorder %s27, 3
        %s814 = scalar_select %p813, %s27, 3
        %p815 = scmp.lt.s32.totalorder %s28, 0
        %s816 = scalar_select %p815, %s28, 0
        %s817 = smul.addr %s816, 2
        %s818 = smul.addr %s814, 2
        %s819 = sadd.s32 %s817, %s818
        %s820 = smul.addr %s819, 8
        %s821 = scalar_lea.vmem %s6, %s820
      $region76: #{learnable_vq_forward.1} parent=59 // pred_fallthru
        _
      // Predicated region
      $region77: #{learnable_vq_forward.1} parent=59 // pred_check
        %p822 = pneg %p264
      $region78: #{learnable_vq_forward.1} parent=59 // pred_check_branch
        %824 = sbr.rel (%p822) target = $region80
      $region79: #{learnable_vq_forward.1} parent=59 // pred_region
        %p825 = scmp.lt.s32.totalorder %s27, 3
        %s826 = scalar_select %p825, %s27, 3
        %p827 = scmp.lt.s32.totalorder %s28, 0
        %s828 = scalar_select %p827, %s28, 0
        %s829 = smul.addr %s828, 2
        %s830 = smul.addr %s826, 2
        %s831 = sadd.s32 %s829, %s830
        %s832 = smul.addr %s831, 8
        %s833 = scalar_lea.vmem %s7, %s832
      $region80: #{learnable_vq_forward.1} parent=59 // pred_fallthru
        _
    $region60: #{learnable_vq_forward.1} parent=5 // pred_fallthru
      _
  $region6: #{learnable_vq_forward.1} parent=0 // loop_footer
    %s18 = sadd.s32 1, %s14
  $region7: #{learnable_vq_forward.1} parent=0 // loop_footer_branch
    %13 = sbr.rel target = $region3
  $region8: #{learnable_vq_forward.1} parent=0 // loop_exit
    _

</llo_original>
